<compile_context>
chip_gen: v6e
topology: v6e:2x2x1
jax: 0.10.0
libtpu: 0.0.40
codegen_flags: <defaults>
</compile_context>

<pallas_src>
import math

import numpy as np
import jax
import jax.numpy as jnp
from jax.experimental import pallas as pl
from jax.experimental.pallas import tpu as pltpu


def _ceil_div(a, b):
    return -(-a // b)


def _tpp_pe_kernel(s_ref, coef_ref, out_ref):
    """One (tn, D_out) tile of the folded time+pitch positional encoding.

    s_ref    : (tn, K)      K = 4*k; per token group: [time, pitch, octave, 1.0] * k
    coef_ref : (K, D_out)   block-diagonal; each (4, d_model) block is
                            [div_time, div_pitch, div_octave, phase]
    out_ref  : (tn, D_out)  D_out = k*d_model (multiple of 128 -> lane-dense store)
    """
    arg = jnp.dot(
        s_ref[...],
        coef_ref[...],
        preferred_element_type=jnp.float32,
        precision=jax.lax.Precision.HIGHEST,  # keep true-f32 products (args can be O(100))
    )
    out_ref[...] = jnp.sin(arg).astype(out_ref.dtype)


def _build_base_coef(d_model):
    """(4, d_model) table: [div_time, div_pitch, div_octave, phase]."""
    dm = d_model // 2          # width of the time sub-encoding (== pitch sub-encoding)
    half = dm // 2             # pitch_class vs. octave split inside the pitch half
    neg_log = -math.log(10000.0)

    coef = np.zeros((4, d_model), dtype=np.float64)

    jt = np.arange(dm)
    coef[0, :dm] = np.exp((jt - (jt % 2)) * (neg_log / dm))

    jp = np.arange(half)
    div_p = np.exp((jp - (jp % 2)) * (neg_log / half))
    coef[1, dm:dm + half] = div_p            # pitch_class region
    coef[2, dm + half:] = div_p              # octave region

    # cos(x) == sin(x + pi/2): odd channels get a pi/2 phase shift.
    coef[3, :] = (np.arange(d_model) % 2) * (np.pi / 2.0)
    return coef.astype(np.float32)


def time_and_pitch_positional_encoding(x, time, octave, d_model, *,
                                       out_dtype=jnp.float32,
                                       out_tile_bytes=2 * 1024 * 1024,
                                       vmem_limit_bytes=32 * 1024 * 1024):
    """JAX wrapper reproducing TimeAndPitchPositionalEncoding.forward."""
    if d_model % 4 != 0:
        raise ValueError("d_model must be a multiple of 4")
    if d_model % 8 != 0:
        # The reference module's odd/cos slice assignments are only
        # shape-consistent when d_model // 4 is even, i.e. d_model % 8 == 0.
        raise ValueError("d_model % 8 != 0 is not representable by the reference module")

    B, S = time.shape
    N = B * S

    # ---- lane-dense folding: k tokens per stored row so that the output row
    #      width k*d_model is a multiple of 128 (full, unmasked stores).
    k = 128 // math.gcd(d_model, 128)
    if k == 1:
        k = 2                       # keep the contraction dim (4*k) a multiple of 8
    K = 4 * k
    D_out = k * d_model

    # ---- pack per-token scalars [time, pitch_class, octave, 1]; the trailing 1
    #      picks up the phase row so the whole affine combine is one MXU matmul.
    scalars = jnp.stack(
        [
            time.reshape(N).astype(jnp.float32),
            x[:, :, 0].reshape(N).astype(jnp.float32),   # pitch_class
            octave.reshape(N).astype(jnp.float32),
            jnp.ones((N,), jnp.float32),
        ],
        axis=1,
    )                                                    # (N, 4)

    # ---- byte-budgeted row tile (output bytes per grid step), minimal padding.
    rows_needed = max(1, _ceil_div(N, k))
    tn_budget = max(8, (out_tile_bytes // (4 * D_out)) // 8 * 8)
    num_tiles = _ceil_div(rows_needed, tn_budget)
    tn = _ceil_div(_ceil_div(rows_needed, num_tiles), 8) * 8
    rows_pad = num_tiles * tn
    n_pad_tokens = rows_pad * k

    if n_pad_tokens > N:
        scalars = jnp.pad(scalars, ((0, n_pad_tokens - N), (0, 0)))
    scalars = scalars.reshape(rows_pad, K)               # k tokens folded per row

    # ---- block-diagonal coefficient table: kron(I_k, base(4, d_model)).
    coef = jnp.asarray(np.kron(np.eye(k, dtype=np.float32), _build_base_coef(d_model)))

    out = pl.pallas_call(
        _tpp_pe_kernel,
        out_shape=jax.ShapeDtypeStruct((rows_pad, D_out), out_dtype),
        grid=(num_tiles,),
        in_specs=[
            pl.BlockSpec((tn, K), lambda i: (i, 0)),          # folded scalars
            pl.BlockSpec((K, D_out), lambda i: (0, 0)),       # coefficient table (resident)
        ],
        out_specs=pl.BlockSpec((tn, D_out), lambda i: (i, 0)),
        compiler_params=pltpu.CompilerParams(
            dimension_semantics=("parallel",),                # shard grid across TCs (v7x)
            vmem_limit_bytes=vmem_limit_bytes,
        ),
    )(scalars, coef)

    # Unfold (rows_pad, k*d_model) -> (rows_pad*k, d_model), drop padding, restore (B, S, D).
    return out.reshape(rows_pad * k, d_model)[:N].reshape(B, S, d_model)


def _reference(x, time, octave, d_model):
    """Pure-JAX transcription of the PyTorch forward (for verification)."""
    dm = d_model // 2
    B, S = time.shape
    div_t = jnp.exp(jnp.arange(0, dm, 2, dtype=jnp.float32) * (-math.log(10000.0) / dm))
    div_p = jnp.exp(jnp.arange(0, dm // 2, 2, dtype=jnp.float32) * (-math.log(10000.0) / (dm // 2)))

    t = time[..., None]
    pc = x[:, :, :1]
    oc = octave[..., None]

    pe_t = jnp.zeros((B, S, dm), jnp.float32)
    pe_t = pe_t.at[:, :, 0::2].set(jnp.sin(t * div_t))
    pe_t = pe_t.at[:, :, 1::2].set(jnp.cos(t * div_t))

    pe_p = jnp.zeros((B, S, dm), jnp.float32)
    pe_p = pe_p.at[:, :, 0:dm // 2:2].set(jnp.sin(pc * div_p))
    pe_p = pe_p.at[:, :, 1:dm // 2:2].set(jnp.cos(pc * div_p))
    pe_p = pe_p.at[:, :, dm // 2::2].set(jnp.sin(oc * div_p))
    pe_p = pe_p.at[:, :, dm // 2 + 1::2].set(jnp.cos(oc * div_p))

    return jnp.concatenate([pe_t, pe_p], axis=2)


if __name__ == "__main__":
    d_model = 32
    B, S, F = 2, 8, 4

    key = jax.random.PRNGKey(0)
    kx, kt, ko = jax.random.split(key, 3)
    x = jax.random.uniform(kx, (B, S, F), jnp.float32, 0.0, 12.0)        # feature 0 = pitch class
    time = jax.random.uniform(kt, (B, S), jnp.float32, 0.0, 100.0)       # onset times
    octave = jax.random.randint(ko, (B, S), 0, 8).astype(jnp.float32)    # octave indices

    out = time_and_pitch_positional_encoding(x, time, octave, d_model)
    out = jax.block_until_ready(out)

    ref = _reference(x, time, octave, d_model)
    assert out.shape == (B, S, d_model)
    # sin(x + pi/2) vs cos(x): error ~ ulp(|x|); time <= 100 keeps it well inside 3e-5.
    assert jnp.allclose(out, ref, atol=3e-5, rtol=1e-5), "mismatch vs reference"

    print("KERNEL_OK")
</pallas_src>

<mosaic_0001>
module attributes {stable_mosaic.version = 11 : i64} {
  func.func @_tpp_pe_kernel(%arg0: i32, %arg1: memref<8x16xf32, #tpu.memory_space<vmem>>, %arg2: memref<16x128xf32, #tpu.memory_space<vmem>>, %arg3: memref<8x128xf32, #tpu.memory_space<vmem>>) attributes {dimension_semantics = [#tpu.dimension_semantics<parallel>], iteration_bounds = array<i64: 1>, scalar_prefetch = 0 : i64, scratch_operands = 0 : i64, tpu.core_type = #tpu.core_type<tc>, window_params = [{transform_indices = @transform_0, window_bounds = array<i64: 8, 16>}, {pipeline_mode = #tpu.pipeline_mode<synchronous>, transform_indices = @transform_1, window_bounds = array<i64: 16, 128>}, {transform_indices = @transform_2, window_bounds = array<i64: 8, 128>}]} {
    %c0 = arith.constant 0 : index
    %c0_0 = arith.constant 0 : index
    %0 = vector.load %arg1[%c0, %c0_0] : memref<8x16xf32, #tpu.memory_space<vmem>>, vector<8x16xf32>
    %c0_1 = arith.constant 0 : index
    %c0_2 = arith.constant 0 : index
    %1 = vector.load %arg2[%c0_1, %c0_2] : memref<16x128xf32, #tpu.memory_space<vmem>>, vector<16x128xf32>
    %cst = arith.constant dense<0.000000e+00> : vector<8x128xf32>
    %2 = tpu.matmul %0, %1, %cst {dimension_numbers = #tpu.dot_dimension_numbers<[1], [0], [0], [1], [0, 0, 1, 1], [], []>, precision = #tpu.contract_precision<fp32>} : vector<8x16xf32>, vector<16x128xf32>, vector<8x128xf32> -> vector<8x128xf32>
    %3 = math.sin %2 : vector<8x128xf32>
    %c0_3 = arith.constant 0 : index
    %c0_4 = arith.constant 0 : index
    %4 = vector.load %arg3[%c0_3, %c0_4] : memref<8x128xf32, #tpu.memory_space<vmem>>, vector<8x128xf32>
    tpu.vector_store %arg3[%c0_3, %c0_4], %3 {strides = array<i32>} : memref<8x128xf32, #tpu.memory_space<vmem>>, vector<8x128xf32>,
    return
  }
  func.func @transform_0(%arg0: i32) -> (i32, i32) {
    %c0_i32 = arith.constant 0 : i32
    %c0_i32_0 = arith.constant 0 : i32
    return %arg0, %c0_i32 : i32, i32
  }
  func.func @transform_1(%arg0: i32) -> (i32, i32) {
    %c0_i32 = arith.constant 0 : i32
    %c0_i32_0 = arith.constant 0 : i32
    %c0_i32_1 = arith.constant 0 : i32
    return %c0_i32, %c0_i32_0 : i32, i32
  }
  func.func @transform_2(%arg0: i32) -> (i32, i32) {
    %c0_i32 = arith.constant 0 : i32
    %c0_i32_0 = arith.constant 0 : i32
    return %arg0, %c0_i32 : i32, i32
  }
}

</mosaic_0001>

<llo_original>
// kernel: tpu_custom_call.1
$region0: #{tpu_custom_call.1}
  #allocation0 [shape = 'u32[]', space=smem, size = 0x4, offset = 0x4, fixed_abs, tag = 'smem constant byte address 0x4 - core index']
  #allocation1 [shape = 'u32[144,128]{1,0:T(1,128)}', space=vmem, size = 0x12000, scoped, tag = 'internal scratch']
  %s0 = inlined_call_operand.hbm [shape: f32[8,16], index: 0, kind: input, shape index: {}]
  %s1 = inlined_call_operand.hbm [shape: f32[16,128], index: 1, kind: input, shape index: {}]
  %s2 = inlined_call_operand.hbm [shape: f32[8,128], index: 2, kind: output, shape index: {}]
  %s3 = sld [smem:[#allocation0]]
  $region26: #{tpu_custom_call.1} parent=0
    _
  %s5 = ssub.s32 1, %s3
  %s6 = scalar_select 0, %s5, %s3
  $region1: #{tpu_custom_call.1} parent=0
    #allocation2 [shape = 'u8[4096]{0}', space=vmem, size = 0x1000, scoped, tag = 'input window, operand 0, single buffered']
    #allocation3 [shape = 's32[1]{0}', space=sflag, size = 0x4, scoped, tag = 'scoped memory for tpu_custom_call.1']
    #allocation4 [shape = 's32[1]{0}', space=sflag, size = 0x4, scoped, tag = 'scoped memory for tpu_custom_call.1']
    #allocation5 [shape = 'u8[8192]{0}', space=vmem, size = 0x2000, scoped, tag = 'input window, operand 1, single buffered']
    #allocation6 [shape = 's32[1]{0}', space=sflag, size = 0x4, scoped, tag = 'scoped memory for tpu_custom_call.1']
    #allocation7 [shape = 'u8[4096]{0}', space=vmem, size = 0x1000, scoped, tag = 'output window, operand 0, single buffered']
    %7 = vsyncpa [#allocation3], 0
    %8 = vsyncpa [#allocation6], 0
    %9 = vsyncpa [#allocation4], 0
    // Predicated region
    $region2: #{tpu_custom_call.1} parent=1 // pred_check
      _
    $region3: #{tpu_custom_call.1} parent=1 // pred_check_branch
      %11 = sbr.rel (0) target = $region5
    $region4: #{tpu_custom_call.1} parent=1 // pred_region
      %s13 = ssub.s32 128, 128
      %14 = vsyncadd [#allocation3], %s13
      %s16 = sshll.u32 [#allocation2], 4
      %s17 = int_to_ptr.vmem [resolvable:$true] %s16
      %19 = dma.hbm_to_vmem [thread:$0]  %s0, 128, %s17, [#allocation3]
    $region5: #{tpu_custom_call.1} parent=1 // pred_fallthru
      _
    // Predicated region
    $region6: #{tpu_custom_call.1} parent=1 // pred_check
      _
    $region7: #{tpu_custom_call.1} parent=1 // pred_check_branch
      %21 = sbr.rel (0) target = $region9
    $region8: #{tpu_custom_call.1} parent=1 // pred_region
      %s23 = ssub.s32 256, 256
      %24 = vsyncadd [#allocation6], %s23
      %s25 = sshll.u32 [#allocation5], 4
      %s26 = int_to_ptr.vmem [resolvable:$true] %s25
      %31 = dma.hbm_to_vmem [thread:$0]  %s1, 256, %s26, [#allocation6], 128, 128, 8
    $region9: #{tpu_custom_call.1} parent=1 // pred_fallthru
      _
    // Predicated region
    $region10: #{tpu_custom_call.1} parent=1 // pred_check
      _
    $region11: #{tpu_custom_call.1} parent=1 // pred_check_branch
      %33 = sbr.rel (0) target = $region13
    $region12: #{tpu_custom_call.1} parent=1 // pred_region
      %34 = dma.done [#allocation3], 128
    $region13: #{tpu_custom_call.1} parent=1 // pred_fallthru
      _
    // Predicated region
    $region14: #{tpu_custom_call.1} parent=1 // pred_check
      _
    $region15: #{tpu_custom_call.1} parent=1 // pred_check_branch
      %36 = sbr.rel (0) target = $region17
    $region16: #{tpu_custom_call.1} parent=1 // pred_region
      %37 = dma.done [#allocation6], 256
    $region17: #{tpu_custom_call.1} parent=1 // pred_fallthru
      _
    %v38 = vld [vmem:[#allocation2] sm:$0xff]
    %v39 = vld [vmem:[#allocation5] sm:$0xff]
    %v40 = vld [vmem:[#allocation5 + $0x8] sm:$0xff]
    %vm41 = vcmask 130048
    %v43 = vsel %vm41, %v38, 0
    %45 = vmatprep.subr.mxu0 0.0
    %46 = vmatpush1.msra.mxu0 0.0
    %47 = vmatprep.subr.mxu0 0.0
    %48 = vmatpush1.msra.mxu0 0.0
    %49 = vmatprep.subr.mxu0 0.0
    %50 = vmatpush1.msra.mxu0 0.0
    %51 = vmatprep.subr.mxu0 0.0
    %52 = vmatpush1.msra.mxu0 0.0
    %53 = vmatprep.subr.mxu0 0.0
    %54 = vmatpush1.msra.mxu0 0.0
    %55 = vmatprep.subr.mxu0 0.0
    %56 = vmatpush1.msra.mxu0 0.0
    %57 = vmatprep.subr.mxu0 0.0
    %58 = vmatpush1.msra.mxu0 0.0
    %59 = vmatprep.subr.mxu0 0.0
    %60 = vmatpush1.msra.mxu0 0.0
    %61 = vmatprep.subr.mxu0 0.0
    %62 = vmatpush1.msra.mxu0 0.0
    %63 = vmatprep.subr.mxu0 0.0
    %64 = vmatpush1.msra.mxu0 0.0
    %65 = vmatprep.subr.mxu0 0.0
    %66 = vmatpush1.msra.mxu0 0.0
    %67 = vmatprep.subr.mxu0 0.0
    %68 = vmatpush1.msra.mxu0 0.0
    %69 = vmatprep.subr.mxu0 0.0
    %70 = vmatpush1.msra.mxu0 0.0
    %71 = vmatprep.subr.mxu0 0.0
    %72 = vmatpush1.msra.mxu0 0.0
    %73 = vmatprep.subr.mxu0 0.0
    %v74 = vand.u32 %v40, 4294901760
    %75 = vmatpush1.msra.mxu0 %v74
    %76 = vmatprep.subr.mxu0 0.0
    %v77 = vand.u32 %v39, 4294901760
    %78 = vmatpush1.msra.mxu0 %v77
    %79 = vmatprep.subr.mxu0 0.0
    %80 = vmatpush2.msra.mxu0 0.0
    %81 = vmatprep.subr.mxu0 0.0
    %82 = vmatpush2.msra.mxu0 0.0
    %83 = vmatprep.subr.mxu0 0.0
    %84 = vmatpush2.msra.mxu0 0.0
    %85 = vmatprep.subr.mxu0 0.0
    %86 = vmatpush2.msra.mxu0 0.0
    %87 = vmatprep.subr.mxu0 0.0
    %88 = vmatpush2.msra.mxu0 0.0
    %89 = vmatprep.subr.mxu0 0.0
    %90 = vmatpush2.msra.mxu0 0.0
    %91 = vmatprep.subr.mxu0 0.0
    %92 = vmatpush2.msra.mxu0 0.0
    %93 = vmatprep.subr.mxu0 0.0
    %94 = vmatpush2.msra.mxu0 0.0
    %95 = vmatprep.subr.mxu0 0.0
    %96 = vmatpush2.msra.mxu0 0.0
    %97 = vmatprep.subr.mxu0 0.0
    %98 = vmatpush2.msra.mxu0 0.0
    %99 = vmatprep.subr.mxu0 0.0
    %100 = vmatpush2.msra.mxu0 0.0
    %101 = vmatprep.subr.mxu0 0.0
    %102 = vmatpush2.msra.mxu0 0.0
    %103 = vmatprep.subr.mxu0 0.0
    %104 = vmatpush2.msra.mxu0 0.0
    %105 = vmatprep.subr.mxu0 0.0
    %106 = vmatpush2.msra.mxu0 0.0
    %107 = vmatprep.subr.mxu0 0.0
    %108 = vmatpush2.msra.mxu0 0.0
    %109 = vmatprep.subr.mxu0 0.0
    %110 = vmatpush2.msra.mxu0 0.0
    %111 = vmatprep.mubr.f32.mxu0 0.0
    %v112 = vand.u32 %v43, 4294901760
    %v113 = vsub.f32 %v43, %v112
    %v114 = vand.u32 %v113, 4294901760
    %v115 = vsub.f32 %v113, %v114
    %v116 = vand.u32 %v115, 4294901760
    %117 = vmatmul.mubr.f32.gmra.mxu0 %v116
    %v118 = vpop.f32.mrf.mxu0
    %v119 = vadd.f32 0.0, %v118
    %v120 = vpop.f32.mrf.mxu0
    %121 = vdwg.mxu0
    %122 = vmatprep.subr.mxu0 0.0
    %123 = vmatpush1.msra.mxu0 0.0
    %124 = vmatprep.subr.mxu0 0.0
    %125 = vmatpush1.msra.mxu0 0.0
    %126 = vmatprep.subr.mxu0 0.0
    %127 = vmatpush1.msra.mxu0 0.0
    %128 = vmatprep.subr.mxu0 0.0
    %129 = vmatpush1.msra.mxu0 0.0
    %130 = vmatprep.subr.mxu0 0.0
    %131 = vmatpush1.msra.mxu0 0.0
    %132 = vmatprep.subr.mxu0 0.0
    %133 = vmatpush1.msra.mxu0 0.0
    %134 = vmatprep.subr.mxu0 0.0
    %135 = vmatpush1.msra.mxu0 0.0
    %136 = vmatprep.subr.mxu0 0.0
    %137 = vmatpush1.msra.mxu0 0.0
    %138 = vmatprep.subr.mxu0 0.0
    %139 = vmatpush1.msra.mxu0 0.0
    %140 = vmatprep.subr.mxu0 0.0
    %141 = vmatpush1.msra.mxu0 0.0
    %142 = vmatprep.subr.mxu0 0.0
    %143 = vmatpush1.msra.mxu0 0.0
    %144 = vmatprep.subr.mxu0 0.0
    %145 = vmatpush1.msra.mxu0 0.0
    %146 = vmatprep.subr.mxu0 0.0
    %147 = vmatpush1.msra.mxu0 0.0
    %148 = vmatprep.subr.mxu0 0.0
    %149 = vmatpush1.msra.mxu0 0.0
    %150 = vmatprep.subr.mxu0 0.0
    %v151 = vand.u32 %v40, 4294901760
    %v152 = vsub.f32 %v40, %v151
    %v153 = vand.u32 %v152, 4294901760
    %v154 = vsub.f32 %v152, %v153
    %v155 = vand.u32 %v154, 4294901760
    %156 = vmatpush1.msra.mxu0 %v155
    %157 = vmatprep.subr.mxu0 0.0
    %v158 = vand.u32 %v39, 4294901760
    %v159 = vsub.f32 %v39, %v158
    %v160 = vand.u32 %v159, 4294901760
    %v161 = vsub.f32 %v159, %v160
    %v162 = vand.u32 %v161, 4294901760
    %163 = vmatpush1.msra.mxu0 %v162
    %164 = vmatprep.subr.mxu0 0.0
    %165 = vmatpush2.msra.mxu0 0.0
    %166 = vmatprep.subr.mxu0 0.0
    %167 = vmatpush2.msra.mxu0 0.0
    %168 = vmatprep.subr.mxu0 0.0
    %169 = vmatpush2.msra.mxu0 0.0
    %170 = vmatprep.subr.mxu0 0.0
    %171 = vmatpush2.msra.mxu0 0.0
    %172 = vmatprep.subr.mxu0 0.0
    %173 = vmatpush2.msra.mxu0 0.0
    %174 = vmatprep.subr.mxu0 0.0
    %175 = vmatpush2.msra.mxu0 0.0
    %176 = vmatprep.subr.mxu0 0.0
    %177 = vmatpush2.msra.mxu0 0.0
    %178 = vmatprep.subr.mxu0 0.0
    %179 = vmatpush2.msra.mxu0 0.0
    %180 = vmatprep.subr.mxu0 0.0
    %181 = vmatpush2.msra.mxu0 0.0
    %182 = vmatprep.subr.mxu0 0.0
    %183 = vmatpush2.msra.mxu0 0.0
    %184 = vmatprep.subr.mxu0 0.0
    %185 = vmatpush2.msra.mxu0 0.0
    %186 = vmatprep.subr.mxu0 0.0
    %187 = vmatpush2.msra.mxu0 0.0
    %188 = vmatprep.subr.mxu0 0.0
    %189 = vmatpush2.msra.mxu0 0.0
    %190 = vmatprep.subr.mxu0 0.0
    %191 = vmatpush2.msra.mxu0 0.0
    %192 = vmatprep.subr.mxu0 0.0
    %193 = vmatpush2.msra.mxu0 0.0
    %194 = vmatprep.subr.mxu0 0.0
    %195 = vmatpush2.msra.mxu0 0.0
    %196 = vmatprep.mubr.f32.mxu0 0.0
    %v197 = vand.u32 %v43, 4294901760
    %198 = vmatmul.mubr.f32.gmra.mxu0 %v197
    %v199 = vpop.f32.mrf.mxu0
    %v200 = vadd.f32 %v119, %v199
    %v201 = vpop.f32.mrf.mxu0
    %202 = vdwg.mxu0
    %203 = vmatprep.subr.mxu0 0.0
    %204 = vmatpush1.msra.mxu0 0.0
    %205 = vmatprep.subr.mxu0 0.0
    %206 = vmatpush1.msra.mxu0 0.0
    %207 = vmatprep.subr.mxu0 0.0
    %208 = vmatpush1.msra.mxu0 0.0
    %209 = vmatprep.subr.mxu0 0.0
    %210 = vmatpush1.msra.mxu0 0.0
    %211 = vmatprep.subr.mxu0 0.0
    %212 = vmatpush1.msra.mxu0 0.0
    %213 = vmatprep.subr.mxu0 0.0
    %214 = vmatpush1.msra.mxu0 0.0
    %215 = vmatprep.subr.mxu0 0.0
    %216 = vmatpush1.msra.mxu0 0.0
    %217 = vmatprep.subr.mxu0 0.0
    %218 = vmatpush1.msra.mxu0 0.0
    %219 = vmatprep.subr.mxu0 0.0
    %220 = vmatpush1.msra.mxu0 0.0
    %221 = vmatprep.subr.mxu0 0.0
    %222 = vmatpush1.msra.mxu0 0.0
    %223 = vmatprep.subr.mxu0 0.0
    %224 = vmatpush1.msra.mxu0 0.0
    %225 = vmatprep.subr.mxu0 0.0
    %226 = vmatpush1.msra.mxu0 0.0
    %227 = vmatprep.subr.mxu0 0.0
    %228 = vmatpush1.msra.mxu0 0.0
    %229 = vmatprep.subr.mxu0 0.0
    %230 = vmatpush1.msra.mxu0 0.0
    %231 = vmatprep.subr.mxu0 0.0
    %v232 = vand.u32 %v40, 4294901760
    %v233 = vsub.f32 %v40, %v232
    %234 = vmatpush1.msra.mxu0 %v233
    %235 = vmatprep.subr.mxu0 0.0
    %v236 = vand.u32 %v39, 4294901760
    %v237 = vsub.f32 %v39, %v236
    %238 = vmatpush1.msra.mxu0 %v237
    %239 = vmatprep.subr.mxu0 0.0
    %240 = vmatpush2.msra.mxu0 0.0
    %241 = vmatprep.subr.mxu0 0.0
    %242 = vmatpush2.msra.mxu0 0.0
    %243 = vmatprep.subr.mxu0 0.0
    %244 = vmatpush2.msra.mxu0 0.0
    %245 = vmatprep.subr.mxu0 0.0
    %246 = vmatpush2.msra.mxu0 0.0
    %247 = vmatprep.subr.mxu0 0.0
    %248 = vmatpush2.msra.mxu0 0.0
    %249 = vmatprep.subr.mxu0 0.0
    %250 = vmatpush2.msra.mxu0 0.0
    %251 = vmatprep.subr.mxu0 0.0
    %252 = vmatpush2.msra.mxu0 0.0
    %253 = vmatprep.subr.mxu0 0.0
    %254 = vmatpush2.msra.mxu0 0.0
    %255 = vmatprep.subr.mxu0 0.0
    %256 = vmatpush2.msra.mxu0 0.0
    %257 = vmatprep.subr.mxu0 0.0
    %258 = vmatpush2.msra.mxu0 0.0
    %259 = vmatprep.subr.mxu0 0.0
    %260 = vmatpush2.msra.mxu0 0.0
    %261 = vmatprep.subr.mxu0 0.0
    %262 = vmatpush2.msra.mxu0 0.0
    %263 = vmatprep.subr.mxu0 0.0
    %264 = vmatpush2.msra.mxu0 0.0
    %265 = vmatprep.subr.mxu0 0.0
    %266 = vmatpush2.msra.mxu0 0.0
    %267 = vmatprep.subr.mxu0 0.0
    %268 = vmatpush2.msra.mxu0 0.0
    %269 = vmatprep.subr.mxu0 0.0
    %270 = vmatpush2.msra.mxu0 0.0
    %271 = vmatprep.mubr.f32.mxu0 0.0
    %v272 = vand.u32 %v43, 4294901760
    %v273 = vsub.f32 %v43, %v272
    %274 = vmatmul.mubr.f32.gmra.mxu0 %v273
    %v275 = vpop.f32.mrf.mxu0
    %v276 = vadd.f32 %v200, %v275
    %v277 = vpop.f32.mrf.mxu0
    %278 = vdwg.mxu0
    %279 = vmatprep.subr.mxu0 0.0
    %280 = vmatpush1.msra.mxu0 0.0
    %281 = vmatprep.subr.mxu0 0.0
    %282 = vmatpush1.msra.mxu0 0.0
    %283 = vmatprep.subr.mxu0 0.0
    %284 = vmatpush1.msra.mxu0 0.0
    %285 = vmatprep.subr.mxu0 0.0
    %286 = vmatpush1.msra.mxu0 0.0
    %287 = vmatprep.subr.mxu0 0.0
    %288 = vmatpush1.msra.mxu0 0.0
    %289 = vmatprep.subr.mxu0 0.0
    %290 = vmatpush1.msra.mxu0 0.0
    %291 = vmatprep.subr.mxu0 0.0
    %292 = vmatpush1.msra.mxu0 0.0
    %293 = vmatprep.subr.mxu0 0.0
    %294 = vmatpush1.msra.mxu0 0.0
    %295 = vmatprep.subr.mxu0 0.0
    %296 = vmatpush1.msra.mxu0 0.0
    %297 = vmatprep.subr.mxu0 0.0
    %298 = vmatpush1.msra.mxu0 0.0
    %299 = vmatprep.subr.mxu0 0.0
    %300 = vmatpush1.msra.mxu0 0.0
    %301 = vmatprep.subr.mxu0 0.0
    %302 = vmatpush1.msra.mxu0 0.0
    %303 = vmatprep.subr.mxu0 0.0
    %304 = vmatpush1.msra.mxu0 0.0
    %305 = vmatprep.subr.mxu0 0.0
    %306 = vmatpush1.msra.mxu0 0.0
    %307 = vmatprep.subr.mxu0 0.0
    %v308 = vand.u32 %v40, 4294901760
    %309 = vmatpush1.msra.mxu0 %v308
    %310 = vmatprep.subr.mxu0 0.0
    %v311 = vand.u32 %v39, 4294901760
    %312 = vmatpush1.msra.mxu0 %v311
    %313 = vmatprep.subr.mxu0 0.0
    %314 = vmatpush2.msra.mxu0 0.0
    %315 = vmatprep.subr.mxu0 0.0
    %316 = vmatpush2.msra.mxu0 0.0
    %317 = vmatprep.subr.mxu0 0.0
    %318 = vmatpush2.msra.mxu0 0.0
    %319 = vmatprep.subr.mxu0 0.0
    %320 = vmatpush2.msra.mxu0 0.0
    %321 = vmatprep.subr.mxu0 0.0
    %322 = vmatpush2.msra.mxu0 0.0
    %323 = vmatprep.subr.mxu0 0.0
    %324 = vmatpush2.msra.mxu0 0.0
    %325 = vmatprep.subr.mxu0 0.0
    %326 = vmatpush2.msra.mxu0 0.0
    %327 = vmatprep.subr.mxu0 0.0
    %328 = vmatpush2.msra.mxu0 0.0
    %329 = vmatprep.subr.mxu0 0.0
    %330 = vmatpush2.msra.mxu0 0.0
    %331 = vmatprep.subr.mxu0 0.0
    %332 = vmatpush2.msra.mxu0 0.0
    %333 = vmatprep.subr.mxu0 0.0
    %334 = vmatpush2.msra.mxu0 0.0
    %335 = vmatprep.subr.mxu0 0.0
    %336 = vmatpush2.msra.mxu0 0.0
    %337 = vmatprep.subr.mxu0 0.0
    %338 = vmatpush2.msra.mxu0 0.0
    %339 = vmatprep.subr.mxu0 0.0
    %340 = vmatpush2.msra.mxu0 0.0
    %341 = vmatprep.subr.mxu0 0.0
    %342 = vmatpush2.msra.mxu0 0.0
    %343 = vmatprep.subr.mxu0 0.0
    %344 = vmatpush2.msra.mxu0 0.0
    %345 = vmatprep.mubr.f32.mxu0 0.0
    %v346 = vand.u32 %v43, 4294901760
    %v347 = vsub.f32 %v43, %v346
    %v348 = vand.u32 %v347, 4294901760
    %349 = vmatmul.mubr.f32.gmra.mxu0 %v348
    %v350 = vpop.f32.mrf.mxu0
    %v351 = vadd.f32 %v276, %v350
    %v352 = vpop.f32.mrf.mxu0
    %353 = vdwg.mxu0
    %354 = vmatprep.subr.mxu0 0.0
    %355 = vmatpush1.msra.mxu0 0.0
    %356 = vmatprep.subr.mxu0 0.0
    %357 = vmatpush1.msra.mxu0 0.0
    %358 = vmatprep.subr.mxu0 0.0
    %359 = vmatpush1.msra.mxu0 0.0
    %360 = vmatprep.subr.mxu0 0.0
    %361 = vmatpush1.msra.mxu0 0.0
    %362 = vmatprep.subr.mxu0 0.0
    %363 = vmatpush1.msra.mxu0 0.0
    %364 = vmatprep.subr.mxu0 0.0
    %365 = vmatpush1.msra.mxu0 0.0
    %366 = vmatprep.subr.mxu0 0.0
    %367 = vmatpush1.msra.mxu0 0.0
    %368 = vmatprep.subr.mxu0 0.0
    %369 = vmatpush1.msra.mxu0 0.0
    %370 = vmatprep.subr.mxu0 0.0
    %371 = vmatpush1.msra.mxu0 0.0
    %372 = vmatprep.subr.mxu0 0.0
    %373 = vmatpush1.msra.mxu0 0.0
    %374 = vmatprep.subr.mxu0 0.0
    %375 = vmatpush1.msra.mxu0 0.0
    %376 = vmatprep.subr.mxu0 0.0
    %377 = vmatpush1.msra.mxu0 0.0
    %378 = vmatprep.subr.mxu0 0.0
    %379 = vmatpush1.msra.mxu0 0.0
    %380 = vmatprep.subr.mxu0 0.0
    %381 = vmatpush1.msra.mxu0 0.0
    %382 = vmatprep.subr.mxu0 0.0
    %v383 = vand.u32 %v40, 4294901760
    %v384 = vsub.f32 %v40, %v383
    %v385 = vand.u32 %v384, 4294901760
    %386 = vmatpush1.msra.mxu0 %v385
    %387 = vmatprep.subr.mxu0 0.0
    %v388 = vand.u32 %v39, 4294901760
    %v389 = vsub.f32 %v39, %v388
    %v390 = vand.u32 %v389, 4294901760
    %391 = vmatpush1.msra.mxu0 %v390
    %392 = vmatprep.subr.mxu0 0.0
    %393 = vmatpush2.msra.mxu0 0.0
    %394 = vmatprep.subr.mxu0 0.0
    %395 = vmatpush2.msra.mxu0 0.0
    %396 = vmatprep.subr.mxu0 0.0
    %397 = vmatpush2.msra.mxu0 0.0
    %398 = vmatprep.subr.mxu0 0.0
    %399 = vmatpush2.msra.mxu0 0.0
    %400 = vmatprep.subr.mxu0 0.0
    %401 = vmatpush2.msra.mxu0 0.0
    %402 = vmatprep.subr.mxu0 0.0
    %403 = vmatpush2.msra.mxu0 0.0
    %404 = vmatprep.subr.mxu0 0.0
    %405 = vmatpush2.msra.mxu0 0.0
    %406 = vmatprep.subr.mxu0 0.0
    %407 = vmatpush2.msra.mxu0 0.0
    %408 = vmatprep.subr.mxu0 0.0
    %409 = vmatpush2.msra.mxu0 0.0
    %410 = vmatprep.subr.mxu0 0.0
    %411 = vmatpush2.msra.mxu0 0.0
    %412 = vmatprep.subr.mxu0 0.0
    %413 = vmatpush2.msra.mxu0 0.0
    %414 = vmatprep.subr.mxu0 0.0
    %415 = vmatpush2.msra.mxu0 0.0
    %416 = vmatprep.subr.mxu0 0.0
    %417 = vmatpush2.msra.mxu0 0.0
    %418 = vmatprep.subr.mxu0 0.0
    %419 = vmatpush2.msra.mxu0 0.0
    %420 = vmatprep.subr.mxu0 0.0
    %421 = vmatpush2.msra.mxu0 0.0
    %422 = vmatprep.subr.mxu0 0.0
    %423 = vmatpush2.msra.mxu0 0.0
    %424 = vmatprep.mubr.f32.mxu0 0.0
    %v425 = vand.u32 %v43, 4294901760
    %426 = vmatmul.mubr.f32.gmra.mxu0 %v425
    %v427 = vpop.f32.mrf.mxu0
    %v428 = vadd.f32 %v351, %v427
    %v429 = vpop.f32.mrf.mxu0
    %430 = vdwg.mxu0
    %431 = vmatprep.subr.mxu0 0.0
    %432 = vmatpush1.msra.mxu0 0.0
    %433 = vmatprep.subr.mxu0 0.0
    %434 = vmatpush1.msra.mxu0 0.0
    %435 = vmatprep.subr.mxu0 0.0
    %436 = vmatpush1.msra.mxu0 0.0
    %437 = vmatprep.subr.mxu0 0.0
    %438 = vmatpush1.msra.mxu0 0.0
    %439 = vmatprep.subr.mxu0 0.0
    %440 = vmatpush1.msra.mxu0 0.0
    %441 = vmatprep.subr.mxu0 0.0
    %442 = vmatpush1.msra.mxu0 0.0
    %443 = vmatprep.subr.mxu0 0.0
    %444 = vmatpush1.msra.mxu0 0.0
    %445 = vmatprep.subr.mxu0 0.0
    %446 = vmatpush1.msra.mxu0 0.0
    %447 = vmatprep.subr.mxu0 0.0
    %448 = vmatpush1.msra.mxu0 0.0
    %449 = vmatprep.subr.mxu0 0.0
    %450 = vmatpush1.msra.mxu0 0.0
    %451 = vmatprep.subr.mxu0 0.0
    %452 = vmatpush1.msra.mxu0 0.0
    %453 = vmatprep.subr.mxu0 0.0
    %454 = vmatpush1.msra.mxu0 0.0
    %455 = vmatprep.subr.mxu0 0.0
    %456 = vmatpush1.msra.mxu0 0.0
    %457 = vmatprep.subr.mxu0 0.0
    %458 = vmatpush1.msra.mxu0 0.0
    %459 = vmatprep.subr.mxu0 0.0
    %v460 = vand.u32 %v40, 4294901760
    %461 = vmatpush1.msra.mxu0 %v460
    %462 = vmatprep.subr.mxu0 0.0
    %v463 = vand.u32 %v39, 4294901760
    %464 = vmatpush1.msra.mxu0 %v463
    %465 = vmatprep.subr.mxu0 0.0
    %466 = vmatpush2.msra.mxu0 0.0
    %467 = vmatprep.subr.mxu0 0.0
    %468 = vmatpush2.msra.mxu0 0.0
    %469 = vmatprep.subr.mxu0 0.0
    %470 = vmatpush2.msra.mxu0 0.0
    %471 = vmatprep.subr.mxu0 0.0
    %472 = vmatpush2.msra.mxu0 0.0
    %473 = vmatprep.subr.mxu0 0.0
    %474 = vmatpush2.msra.mxu0 0.0
    %475 = vmatprep.subr.mxu0 0.0
    %476 = vmatpush2.msra.mxu0 0.0
    %477 = vmatprep.subr.mxu0 0.0
    %478 = vmatpush2.msra.mxu0 0.0
    %479 = vmatprep.subr.mxu0 0.0
    %480 = vmatpush2.msra.mxu0 0.0
    %481 = vmatprep.subr.mxu0 0.0
    %482 = vmatpush2.msra.mxu0 0.0
    %483 = vmatprep.subr.mxu0 0.0
    %484 = vmatpush2.msra.mxu0 0.0
    %485 = vmatprep.subr.mxu0 0.0
    %486 = vmatpush2.msra.mxu0 0.0
    %487 = vmatprep.subr.mxu0 0.0
    %488 = vmatpush2.msra.mxu0 0.0
    %489 = vmatprep.subr.mxu0 0.0
    %490 = vmatpush2.msra.mxu0 0.0
    %491 = vmatprep.subr.mxu0 0.0
    %492 = vmatpush2.msra.mxu0 0.0
    %493 = vmatprep.subr.mxu0 0.0
    %494 = vmatpush2.msra.mxu0 0.0
    %495 = vmatprep.subr.mxu0 0.0
    %496 = vmatpush2.msra.mxu0 0.0
    %497 = vmatprep.mubr.f32.mxu0 0.0
    %v498 = vand.u32 %v43, 4294901760
    %499 = vmatmul.mubr.f32.gmra.mxu0 %v498
    %v500 = vpop.f32.mrf.mxu0
    %v501 = vadd.f32 %v428, %v500
    %v502 = vpop.f32.mrf.mxu0
    %503 = vdwg.mxu0
    %v504 = vand.u32 2147483647, %v501
    %vm505 = vcmp.le.f32.partialorder %v504, 0.7853982
    %vm506 = vcmp.lt.s32.totalorder %v501, 0
    %v507 = vand.u32 %v501, 2139095040
    %v508 = vshrl.u32 %v507, 23
    %v509 = vsub.s32 %v508, 127
    %v510 = vand.u32 2147483647, %v501
    %v511 = vand.u32 %v510, 8388607
    %v512 = vor.u32 %v511, 8388608
    %v513 = vsub.s32 0, %v512
    %v514 = vadd.s32 %v509, 1
    %vm515 = vcmp.gt.s32.totalorder %v514, 0
    %v516 = vsel %vm515, %v514, 0
    %v517 = vshrl.u32 %v516, 5
    %v518 = vand.u32 %v516, 31
    %v519 = vsub.s32 32, %v518
    %v520 = vshrl.u32 683565275, %v519
    %v521 = vshll.u32 683565275, %v518
    %v522 = vshrl.u32 2475754826, %v519
    %v523 = vor.u32 %v521, %v522
    %v524 = vshll.u32 2475754826, %v518
    %v525 = vshrl.u32 2131351028, %v519
    %v526 = vor.u32 %v524, %v525
    %v527 = vshll.u32 2131351028, %v518
    %v528 = vshrl.u32 2102212464, %v519
    %v529 = vor.u32 %v527, %v528
    %v530 = vshll.u32 2102212464, %v518
    %v531 = vshrl.u32 920167782, %v519
    %v532 = vor.u32 %v530, %v531
    %v533 = vshll.u32 920167782, %v518
    %v534 = vshrl.u32 1326507024, %v519
    %v535 = vor.u32 %v533, %v534
    %vm536 = vcmp.lt.s32.totalorder %v517, 1
    %vm537 = vcmp.lt.s32.totalorder %v517, 2
    %vm538 = vcmp.lt.s32.totalorder %v517, 3
    %vm539 = vcmp.lt.s32.totalorder %v517, 4
    %v540 = vsel %vm536, %v520, %v523
    %v541 = vsel %vm539, %v529, 2102212464
    %v542 = vsel %vm538, %v526, %v541
    %v543 = vsel %vm537, %v540, %v542
    %v544 = vsel %vm536, %v523, %v526
    %v545 = vsel %vm539, %v532, 920167782
    %v546 = vsel %vm538, %v529, %v545
    %v547 = vsel %vm537, %v544, %v546
    %v548 = vsel %vm536, %v526, %v529
    %v549 = vsel %vm539, %v535, 1326507024
    %v550 = vsel %vm538, %v532, %v549
    %v551 = vsel %vm537, %v548, %v550
    %v552 = vshll.u32 %v512, 8
    %v553 = vmul.u32.u64.compose %v552, %v551
    %v554 = vextract.low.u32 %v553
    %v555 = vextract.high.u32 %v553
    %v556 = vmul.u32.u64.compose %v552, %v547
    %v557 = vextract.low.u32 %v556
    %v558 = vextract.high.u32 %v556
    %v559 = vmul.u32 %v552, %v543
    %v560 = vadd.s32 %v555, %v557
    %vm561 = vc.u32 %v555, %v557
    %v562 = vadd.s32 %v558, 1
    %v563 = vsel %vm561, %v562, %v558
    %v564 = vadd.s32 %v559, %v563
    %v565 = vadd.s32 %v564, 536870912
    %v566 = vshrl.u32 %v565, 30
    %v567 = vshll.u32 %v566, 30
    %v568 = vsub.s32 %v564, %v567
    %vm569 = vcmp.lt.s32.totalorder %v568, 0
    %v570 = vsub.s32 0, %v568
    %v571 = vsel %vm569, %v570, %v568
    %v572 = vclz %v571
    %v573 = vsub.s32 %v572, 2
    %vm574 = vcmp.gt.s32.totalorder 0, %v573
    %v575 = vsel %vm574, 0, %v573
    %v576 = vsub.s32 32, %v575
    %v577 = vshll.u32 %v568, %v575
    %v578 = vshrl.u32 %v560, %v576
    %v579 = vor.u32 %v577, %v578
    %v580 = vsub.s32 4294967266, %v575
    %v581 = vadd.s32 %v580, 127
    %v582 = vshll.u32 %v581, 23
    %v583 = vor.u32 4788187, %v582
    %v584 = vand.u32 2147483647, %v583
    %v586 = vcvt.s32.f32 %v579
    %v587 = vmul.f32 %v586, %v584
    %v588 = vxor.u32 %v587, 2147483648
    %v589 = vsel %vm506, %v588, %v587
    %v590 = vsub.s32 4, %v566
    %v591 = vsel %vm506, %v590, %v566
    %v592 = vsel %vm505, %v501, %v589
    %v593 = vsel %vm505, 0, %v591
    %v594 = vcosq.f32.pop %v592
    %v595 = vsinq.f32.pop %v592
    %vm596 = vweird.f32 %v501
    %v597 = vadd.s32 %v593, 3
    %v598 = vand.u32 %v597, 3
    %vm599 = vcmp.lt.s32.totalorder %v598, 2
    %vm600 = vcmp.eq.s32.totalorder %v598, 0
    %v601 = vxor.u32 %v595, 2147483648
    %v602 = vsel %vm600, %v594, %v601
    %vm603 = vcmp.eq.s32.totalorder %v598, 2
    %v604 = vxor.u32 %v594, 2147483648
    %v605 = vsel %vm603, %v604, %v595
    %v606 = vsel %vm599, %v602, %v605
    %v607 = vsel %vm596, nan, %v606
    %608 = vst [vmem:[#allocation7] sm:$0xff] %v607
    // Predicated region
    $region18: #{tpu_custom_call.1} parent=1 // pred_check
      _
    $region19: #{tpu_custom_call.1} parent=1 // pred_check_branch
      %610 = sbr.rel (0) target = $region21
    $region20: #{tpu_custom_call.1} parent=1 // pred_region
      %s612 = ssub.s32 128, 128
      %613 = vsyncadd [#allocation4], %s612
      %s615 = sshll.u32 [#allocation7], 4
      %s616 = int_to_ptr.vmem [resolvable:$true] %s615
      %618 = dma.vmem_to_hbm [thread:$0]  %s616, 128, %s2, [#allocation4]
    $region21: #{tpu_custom_call.1} parent=1 // pred_fallthru
      _
    // Predicated region
    $region22: #{tpu_custom_call.1} parent=1 // pred_check
      _
    $region23: #{tpu_custom_call.1} parent=1 // pred_check_branch
      %620 = sbr.rel (0) target = $region25
    $region24: #{tpu_custom_call.1} parent=1 // pred_region
      %621 = dma.done [#allocation4], 128
    $region25: #{tpu_custom_call.1} parent=1 // pred_fallthru
      _
    %622 = vsyncpa [#allocation3], 1
    %623 = vsyncpa [#allocation6], 1
    %624 = vsyncpa [#allocation4], 1

</llo_original>
